<compile_context>
chip_gen: v5e
topology: v5e:2x2
jax: 0.10.0
libtpu: 0.0.40
codegen_flags: <defaults>
</compile_context>

<pallas_src>
import jax
import jax.numpy as jnp
from jax import lax
from jax.experimental import pallas as pl
from jax.experimental.pallas import tpu as pltpu


def _round_up(x: int, m: int) -> int:
    return (x + m - 1) // m * m


def _contrastive_kernel(x1_ref, x2_ref, w1_ref, b1_ref, w2_ref, b2_ref, out_ref):
    """One batch tile.

    x1_ref, x2_ref : [TILE_B, D_in]    f32 (raw activations)
    w1_ref         : [D_in,  H_pad]    bf16 (VMEM-resident across the grid)
    b1_ref, b2_ref : [1, H_pad]        f32
    w2_ref         : [H_pad, H_pad]    bf16 (VMEM-resident across the grid)
    out_ref        : [1, TILE_B]       f32 (lane-dense cosine-similarity row)
    """
    w1 = w1_ref[...]
    w2 = w2_ref[...]
    b1 = b1_ref[...]
    b2 = b2_ref[...]

    def embed(x_f32):
        # bf16 MXU operands, f32 accumulate; bias + ReLU in f32.
        h = jnp.dot(x_f32.astype(w1.dtype), w1,
                    preferred_element_type=jnp.float32) + b1
        h = jnp.maximum(h, 0.0)
        return jnp.dot(h.astype(w2.dtype), w2,
                       preferred_element_type=jnp.float32) + b2

    e1 = embed(x1_ref[...])          # (TILE_B, H_pad) f32
    e2 = embed(x2_ref[...])

    dot = jnp.sum(e1 * e2, axis=-1)          # (TILE_B,)
    n1sq = jnp.sum(e1 * e1, axis=-1)
    n2sq = jnp.sum(e2 * e2, axis=-1)
    # cos = dot / max(||e1||*||e2||, 1e-8) == dot * rsqrt(max(n1sq*n2sq, 1e-16))
    cos = dot * lax.rsqrt(jnp.maximum(n1sq * n2sq, 1e-16))
    out_ref[...] = cos.reshape(out_ref.shape)  # lane-dense (1, TILE_B) row


def contrastive_network_forward(x1, x2, w1, b1, w2, b2, *, tile_b=None):
    """JAX wrapper.

    x1, x2: [B, D_in];  w1: [D_in, H];  b1: [H];  w2: [H, H];  b2: [H]
    (weights stored transposed vs. torch so the kernel computes x @ W + b).
    Returns [B] float32 cosine similarities.
    """
    f32, bf16 = jnp.float32, jnp.bfloat16

    x1 = jnp.asarray(x1, f32)
    x2 = jnp.asarray(x2, f32)
    B, D_in = x1.shape
    H = w1.shape[1]
    H_pad = _round_up(H, 128)          # lane-dense hidden dim (weights only)

    if tile_b is None:
        # Large tiles amortize the ~0.35 us/step overhead; cap so that the
        # f32 activation tiles + in-kernel f32 intermediates stay well inside
        # scoped VMEM, and keep >= 2 grid steps when the batch allows it so
        # the "parallel" axis shards across v7x's 2 TensorCores.
        per_row_bytes = 16 * D_in + 32 * H_pad
        vmem_cap_rows = max(8, ((24 << 20) // per_row_bytes) // 8 * 8)
        tile_b = min(2048, vmem_cap_rows, _round_up(B, 8))
        if B > 8:
            tile_b = min(tile_b, _round_up((B + 1) // 2, 8))
    tile_b = max(8, _round_up(tile_b, 8))      # f32 sublane packing
    B_pad = _round_up(B, tile_b)
    n_blocks = B_pad // tile_b

    # Pad the batch only if needed (padded rows are sliced off below; they
    # cannot NaN because of the 1e-16 clamp in the epilogue).
    if B_pad != B:
        x1 = jnp.pad(x1, ((0, B_pad - B), (0, 0)))
        x2 = jnp.pad(x2, ((0, B_pad - B), (0, 0)))

    # Weights/biases: pad hidden dim to a multiple of 128 (zero padding is
    # exact: padded hidden cols get zero weights/biases, padded W2 rows are
    # zero, so padded embedding columns are exactly 0).  bf16 for the MXU.
    def pad_w(w, rows, cols):
        w = jnp.asarray(w, f32)
        return jnp.pad(w, ((0, rows - w.shape[0]),
                           (0, cols - w.shape[1]))).astype(bf16)

    w1_p = pad_w(w1, D_in, H_pad)                 # no padding on D_in
    w2_p = pad_w(w2, H_pad, H_pad)
    b1_p = jnp.pad(jnp.asarray(b1, f32), (0, H_pad - H)).reshape(1, H_pad)
    b2_p = jnp.pad(jnp.asarray(b2, f32), (0, H_pad - H)).reshape(1, H_pad)

    flops = 4 * B_pad * H_pad * (D_in + H_pad)
    bytes_accessed = (2 * B_pad * D_in * 4          # x1 + x2 (f32, read once)
                      + (D_in + H_pad) * H_pad * 2  # W1 + W2 (bf16, resident)
                      + 2 * H_pad * 4               # biases (f32)
                      + B_pad * 4)                  # lane-dense output (f32)

    # Conservative VMEM budget (double-buffered tiles + resident weights +
    # f32 intermediates); explicitly raise the scoped limit (v5e default is
    # only 16 MiB) while staying under v7x's 64 MiB physical VMEM.
    vmem_est = (2 * 2 * tile_b * D_in * 4
                + 2 * (D_in + H_pad) * H_pad * 2
                + 2 * 2 * H_pad * 4
                + 2 * tile_b * 4
                + 8 * tile_b * H_pad * 4)
    vmem_limit = int(min(max(32 << 20, 2 * vmem_est), 48 << 20))

    out = pl.pallas_call(
        _contrastive_kernel,
        out_shape=jax.ShapeDtypeStruct((n_blocks, tile_b), f32),
        grid_spec=pltpu.PrefetchScalarGridSpec(
            num_scalar_prefetch=0,
            grid=(n_blocks,),
            in_specs=[
                pl.BlockSpec((tile_b, D_in), lambda i: (i, 0)),   # x1 tile (f32)
                pl.BlockSpec((tile_b, D_in), lambda i: (i, 0)),   # x2 tile (f32)
                pl.BlockSpec((D_in, H_pad), lambda i: (0, 0)),    # W1 (resident)
                pl.BlockSpec((1, H_pad), lambda i: (0, 0)),       # b1 (resident)
                pl.BlockSpec((H_pad, H_pad), lambda i: (0, 0)),   # W2 (resident)
                pl.BlockSpec((1, H_pad), lambda i: (0, 0)),       # b2 (resident)
            ],
            out_specs=pl.BlockSpec((1, tile_b), lambda i: (i, 0)),
        ),
        compiler_params=pltpu.CompilerParams(
            dimension_semantics=("parallel",),
            vmem_limit_bytes=vmem_limit,
        ),
        cost_estimate=pl.CostEstimate(
            flops=flops, transcendentals=B_pad, bytes_accessed=bytes_accessed),
    )(x1, x2, w1_p, b1_p, w2_p, b2_p)

    return out.reshape(B_pad)[:B]


def _reference_forward_f32(x1, x2, w1, b1, w2, b2):
    """Pure-f32 JAX reference (mirrors the PyTorch module)."""
    def embed(x):
        return jnp.maximum(x @ w1 + b1, 0.0) @ w2 + b2
    e1, e2 = embed(x1), embed(x2)
    dot = jnp.sum(e1 * e2, axis=-1)
    n1 = jnp.linalg.norm(e1, axis=-1)
    n2 = jnp.linalg.norm(e2, axis=-1)
    return dot / jnp.maximum(n1 * n2, 1e-8)


def _reference_forward_bf16(x1, x2, w1, b1, w2, b2):
    """Reference matching the kernel's bf16-operand / f32-accumulate path."""
    bf16, f32 = jnp.bfloat16, jnp.float32

    def embed(x):
        h = jnp.dot(x.astype(bf16), w1.astype(bf16),
                    preferred_element_type=f32) + b1.astype(f32)
        h = jnp.maximum(h, 0.0)
        return jnp.dot(h.astype(bf16), w2.astype(bf16),
                       preferred_element_type=f32) + b2.astype(f32)

    e1, e2 = embed(x1), embed(x2)
    dot = jnp.sum(e1 * e2, axis=-1)
    nsq = jnp.sum(e1 * e1, axis=-1) * jnp.sum(e2 * e2, axis=-1)
    return dot * lax.rsqrt(jnp.maximum(nsq, 1e-16))


if __name__ == "__main__":
    key = jax.random.PRNGKey(0)
    k_x1, k_x2, k_w1, k_b1, k_w2, k_b2 = jax.random.split(key, 6)

    B = 8          # batch
    shape_in = 32  # input feature dim
    hidden = 32    # hidden dim

    x1 = jax.random.normal(k_x1, (B, shape_in), dtype=jnp.float32)
    x2 = jax.random.normal(k_x2, (B, shape_in), dtype=jnp.float32)

    lim1 = 1.0 / (shape_in ** 0.5)
    lim2 = 1.0 / (hidden ** 0.5)
    w1 = jax.random.uniform(k_w1, (shape_in, hidden), minval=-lim1, maxval=lim1)
    b1 = jax.random.uniform(k_b1, (hidden,), minval=-lim1, maxval=lim1)
    w2 = jax.random.uniform(k_w2, (hidden, hidden), minval=-lim2, maxval=lim2)
    b2 = jax.random.uniform(k_b2, (hidden,), minval=-lim2, maxval=lim2)

    out = contrastive_network_forward(x1, x2, w1, b1, w2, b2)
    out = jax.block_until_ready(out)
    assert out.shape == (B,)

    ref_bf16 = _reference_forward_bf16(x1, x2, w1, b1, w2, b2)
    ref_f32 = _reference_forward_f32(x1, x2, w1, b1, w2, b2)
    assert jnp.allclose(out, ref_bf16, atol=2e-3, rtol=2e-3), (out, ref_bf16)
    assert jnp.allclose(out, ref_f32, atol=5e-2), (out, ref_f32)

    # Second case: B not a multiple of the tile, multi-step grid (exercises
    # batch padding, pipelined activation tiles, resident weights and the
    # lane-dense [n_blocks, tile_b] output slab).
    B2 = 40
    x1b = jax.random.normal(jax.random.PRNGKey(1), (B2, shape_in), dtype=jnp.float32)
    x2b = jax.random.normal(jax.random.PRNGKey(2), (B2, shape_in), dtype=jnp.float32)
    out2 = contrastive_network_forward(x1b, x2b, w1, b1, w2, b2, tile_b=16)
    out2 = jax.block_until_ready(out2)
    ref2 = _reference_forward_bf16(x1b, x2b, w1, b1, w2, b2)
    assert out2.shape == (B2,)
    assert jnp.allclose(out2, ref2, atol=2e-3, rtol=2e-3), (out2, ref2)

    # Third case: default tile selection with a non-128-multiple hidden dim
    # (exercises the hidden-dim zero padding and the >=2-step parallel grid).
    B3, hidden3 = 96, 72
    k3 = jax.random.split(jax.random.PRNGKey(3), 6)
    x1c = jax.random.normal(k3[0], (B3, shape_in), dtype=jnp.float32)
    x2c = jax.random.normal(k3[1], (B3, shape_in), dtype=jnp.float32)
    lim1c = 1.0 / (shape_in ** 0.5)
    lim2c = 1.0 / (hidden3 ** 0.5)
    w1c = jax.random.uniform(k3[2], (shape_in, hidden3), minval=-lim1c, maxval=lim1c)
    b1c = jax.random.uniform(k3[3], (hidden3,), minval=-lim1c, maxval=lim1c)
    w2c = jax.random.uniform(k3[4], (hidden3, hidden3), minval=-lim2c, maxval=lim2c)
    b2c = jax.random.uniform(k3[5], (hidden3,), minval=-lim2c, maxval=lim2c)
    out3 = contrastive_network_forward(x1c, x2c, w1c, b1c, w2c, b2c)
    out3 = jax.block_until_ready(out3)
    ref3 = _reference_forward_bf16(x1c, x2c, w1c, b1c, w2c, b2c)
    assert out3.shape == (B3,)
    assert jnp.allclose(out3, ref3, atol=2e-3, rtol=2e-3), (out3, ref3)

    print("KERNEL_OK")
</pallas_src>

<mosaic_0001>
module attributes {stable_mosaic.version = 11 : i64} {
  func.func @_contrastive_kernel(%arg0: i32, %arg1: memref<8x32xf32, #tpu.memory_space<vmem>>, %arg2: memref<8x32xf32, #tpu.memory_space<vmem>>, %arg3: memref<32x128xbf16, #tpu.memory_space<vmem>>, %arg4: memref<1x128xf32, #tpu.memory_space<vmem>>, %arg5: memref<128x128xbf16, #tpu.memory_space<vmem>>, %arg6: memref<1x128xf32, #tpu.memory_space<vmem>>, %arg7: memref<1x8xf32, #tpu.memory_space<vmem>>) attributes {dimension_semantics = [#tpu.dimension_semantics<parallel>], iteration_bounds = array<i64: 1>, scalar_prefetch = 0 : i64, scratch_operands = 0 : i64, tpu.core_type = #tpu.core_type<tc>, window_params = [{transform_indices = @transform_0, window_bounds = array<i64: 8, 32>}, {transform_indices = @transform_1, window_bounds = array<i64: 8, 32>}, {pipeline_mode = #tpu.pipeline_mode<synchronous>, transform_indices = @transform_2, window_bounds = array<i64: 32, 128>}, {pipeline_mode = #tpu.pipeline_mode<synchronous>, transform_indices = @transform_3, window_bounds = array<i64: 1, 128>}, {pipeline_mode = #tpu.pipeline_mode<synchronous>, transform_indices = @transform_4, window_bounds = array<i64: 128, 128>}, {pipeline_mode = #tpu.pipeline_mode<synchronous>, transform_indices = @transform_5, window_bounds = array<i64: 1, 128>}, {transform_indices = @transform_6, window_bounds = array<i64: 1, 8>}]} {
    %c0 = arith.constant 0 : index
    %c0_0 = arith.constant 0 : index
    %0 = vector.load %arg3[%c0, %c0_0] : memref<32x128xbf16, #tpu.memory_space<vmem>>, vector<32x128xbf16>
    %c0_1 = arith.constant 0 : index
    %c0_2 = arith.constant 0 : index
    %1 = vector.load %arg5[%c0_1, %c0_2] : memref<128x128xbf16, #tpu.memory_space<vmem>>, vector<128x128xbf16>
    %c0_3 = arith.constant 0 : index
    %c0_4 = arith.constant 0 : index
    %2 = vector.load %arg4[%c0_3, %c0_4] : memref<1x128xf32, #tpu.memory_space<vmem>>, vector<1x128xf32>
    %c0_5 = arith.constant 0 : index
    %c0_6 = arith.constant 0 : index
    %3 = vector.load %arg6[%c0_5, %c0_6] : memref<1x128xf32, #tpu.memory_space<vmem>>, vector<1x128xf32>
    %c0_7 = arith.constant 0 : index
    %c0_8 = arith.constant 0 : index
    %4 = vector.load %arg1[%c0_7, %c0_8] : memref<8x32xf32, #tpu.memory_space<vmem>>, vector<8x32xf32>
    %5 = arith.truncf %4 : vector<8x32xf32> to vector<8x32xbf16>
    %cst = arith.constant dense<0.000000e+00> : vector<8x128xf32>
    %6 = tpu.matmul %5, %0, %cst {dimension_numbers = #tpu.dot_dimension_numbers<[1], [0], [0], [1], [0, 0, 1, 1], [], []>} : vector<8x32xbf16>, vector<32x128xbf16>, vector<8x128xf32> -> vector<8x128xf32>
    %7 = vector.broadcast %2 : vector<1x128xf32> to vector<8x128xf32>
    %8 = arith.addf %6, %7 : vector<8x128xf32>
    %cst_9 = arith.constant 0.000000e+00 : f32
    %9 = vector.broadcast %cst_9 : f32 to vector<8x128xf32>
    %10 = arith.maximumf %8, %9 : vector<8x128xf32>
    %11 = arith.truncf %10 : vector<8x128xf32> to vector<8x128xbf16>
    %cst_10 = arith.constant dense<0.000000e+00> : vector<8x128xf32>
    %12 = tpu.matmul %11, %1, %cst_10 {dimension_numbers = #tpu.dot_dimension_numbers<[1], [0], [0], [1], [0, 0, 1, 1], [], []>} : vector<8x128xbf16>, vector<128x128xbf16>, vector<8x128xf32> -> vector<8x128xf32>
    %13 = vector.broadcast %3 : vector<1x128xf32> to vector<8x128xf32>
    %14 = arith.addf %12, %13 : vector<8x128xf32>
    %c0_11 = arith.constant 0 : index
    %c0_12 = arith.constant 0 : index
    %15 = vector.load %arg2[%c0_11, %c0_12] : memref<8x32xf32, #tpu.memory_space<vmem>>, vector<8x32xf32>
    %16 = arith.truncf %15 : vector<8x32xf32> to vector<8x32xbf16>
    %cst_13 = arith.constant dense<0.000000e+00> : vector<8x128xf32>
    %17 = tpu.matmul %16, %0, %cst_13 {dimension_numbers = #tpu.dot_dimension_numbers<[1], [0], [0], [1], [0, 0, 1, 1], [], []>} : vector<8x32xbf16>, vector<32x128xbf16>, vector<8x128xf32> -> vector<8x128xf32>
    %18 = vector.broadcast %2 : vector<1x128xf32> to vector<8x128xf32>
    %19 = arith.addf %17, %18 : vector<8x128xf32>
    %cst_14 = arith.constant 0.000000e+00 : f32
    %20 = vector.broadcast %cst_14 : f32 to vector<8x128xf32>
    %21 = arith.maximumf %19, %20 : vector<8x128xf32>
    %22 = arith.truncf %21 : vector<8x128xf32> to vector<8x128xbf16>
    %cst_15 = arith.constant dense<0.000000e+00> : vector<8x128xf32>
    %23 = tpu.matmul %22, %1, %cst_15 {dimension_numbers = #tpu.dot_dimension_numbers<[1], [0], [0], [1], [0, 0, 1, 1], [], []>} : vector<8x128xbf16>, vector<128x128xbf16>, vector<8x128xf32> -> vector<8x128xf32>
    %24 = vector.broadcast %3 : vector<1x128xf32> to vector<8x128xf32>
    %25 = arith.addf %23, %24 : vector<8x128xf32>
    %26 = arith.mulf %14, %25 : vector<8x128xf32>
    %cst_16 = arith.constant dense<0.000000e+00> : vector<8xf32>
    %27 = vector.multi_reduction <add>, %26, %cst_16 [1] : vector<8x128xf32> to vector<8xf32>
    %28 = arith.mulf %14, %14 : vector<8x128xf32>
    %cst_17 = arith.constant dense<0.000000e+00> : vector<8xf32>
    %29 = vector.multi_reduction <add>, %28, %cst_17 [1] : vector<8x128xf32> to vector<8xf32>
    %30 = arith.mulf %25, %25 : vector<8x128xf32>
    %cst_18 = arith.constant dense<0.000000e+00> : vector<8xf32>
    %31 = vector.multi_reduction <add>, %30, %cst_18 [1] : vector<8x128xf32> to vector<8xf32>
    %32 = arith.mulf %29, %31 : vector<8xf32>
    %cst_19 = arith.constant 1.000000e-16 : f32
    %33 = vector.broadcast %cst_19 : f32 to vector<8xf32>
    %34 = arith.maximumf %32, %33 : vector<8xf32>
    %35 = math.rsqrt %34 : vector<8xf32>
    %36 = arith.mulf %27, %35 : vector<8xf32>
    %37 = vector.shape_cast %36 : vector<8xf32> to vector<1x8xf32>
    %c0_20 = arith.constant 0 : index
    %c0_21 = arith.constant 0 : index
    %38 = vector.load %arg7[%c0_20, %c0_21] : memref<1x8xf32, #tpu.memory_space<vmem>>, vector<1x8xf32>
    tpu.vector_store %arg7[%c0_20, %c0_21], %37 {strides = array<i32>} : memref<1x8xf32, #tpu.memory_space<vmem>>, vector<1x8xf32>,
    return
  }
  func.func @transform_0(%arg0: i32) -> (i32, i32) {
    %c0_i32 = arith.constant 0 : i32
    %c0_i32_0 = arith.constant 0 : i32
    return %arg0, %c0_i32 : i32, i32
  }
  func.func @transform_1(%arg0: i32) -> (i32, i32) {
    %c0_i32 = arith.constant 0 : i32
    %c0_i32_0 = arith.constant 0 : i32
    return %arg0, %c0_i32 : i32, i32
  }
  func.func @transform_2(%arg0: i32) -> (i32, i32) {
    %c0_i32 = arith.constant 0 : i32
    %c0_i32_0 = arith.constant 0 : i32
    %c0_i32_1 = arith.constant 0 : i32
    return %c0_i32, %c0_i32_0 : i32, i32
  }
  func.func @transform_3(%arg0: i32) -> (i32, i32) {
    %c0_i32 = arith.constant 0 : i32
    %c0_i32_0 = arith.constant 0 : i32
    %c0_i32_1 = arith.constant 0 : i32
    return %c0_i32, %c0_i32_0 : i32, i32
  }
  func.func @transform_4(%arg0: i32) -> (i32, i32) {
    %c0_i32 = arith.constant 0 : i32
    %c0_i32_0 = arith.constant 0 : i32
    %c0_i32_1 = arith.constant 0 : i32
    return %c0_i32, %c0_i32_0 : i32, i32
  }
  func.func @transform_5(%arg0: i32) -> (i32, i32) {
    %c0_i32 = arith.constant 0 : i32
    %c0_i32_0 = arith.constant 0 : i32
    %c0_i32_1 = arith.constant 0 : i32
    return %c0_i32, %c0_i32_0 : i32, i32
  }
  func.func @transform_6(%arg0: i32) -> (i32, i32) {
    %c0_i32 = arith.constant 0 : i32
    %c0_i32_0 = arith.constant 0 : i32
    return %arg0, %c0_i32 : i32, i32
  }
}

</mosaic_0001>

<llo_original>
// kernel: tpu_custom_call.1
$region0: #{tpu_custom_call.1}
  #allocation0 [shape = 'u32[]', space=smem, size = 0x4, offset = 0x4, fixed_abs, tag = 'smem constant byte address 0x4 - core index']
  #allocation1 [shape = 'u32[72,128]{1,0:T(1,128)}', space=vmem, size = 0x9000, scoped, tag = 'internal scratch']
  %s0 = inlined_call_operand.hbm [shape: f32[8,32], index: 0, kind: input, shape index: {}]
  %s1 = inlined_call_operand.hbm [shape: f32[8,32], index: 1, kind: input, shape index: {}]
  %s2 = inlined_call_operand.hbm [shape: bf16[32,128], index: 2, kind: input, shape index: {}]
  %s3 = inlined_call_operand.vmem [shape: f32[1,128], index: 3, kind: input, shape index: {}]
  %s4 = inlined_call_operand.hbm [shape: bf16[128,128], index: 4, kind: input, shape index: {}]
  %s5 = inlined_call_operand.vmem [shape: f32[1,128], index: 5, kind: input, shape index: {}]
  %s6 = inlined_call_operand.hbm [shape: f32[1,8], index: 6, kind: output, shape index: {}]
  %s7 = sld [smem:[#allocation0]]
  $region50: #{tpu_custom_call.1} parent=0
    _
  %s9 = ssub.s32 1, %s7
  %s10 = scalar_select 0, %s9, %s7
  $region1: #{tpu_custom_call.1} parent=0
    #allocation2 [shape = 'u8[4096]{0}', space=vmem, size = 0x1000, scoped, tag = 'input window, operand 0, single buffered']
    #allocation3 [shape = 's32[1]{0}', space=sflag, size = 0x4, scoped, tag = 'scoped memory for tpu_custom_call.1']
    #allocation4 [shape = 's32[1]{0}', space=sflag, size = 0x4, scoped, tag = 'scoped memory for tpu_custom_call.1']
    #allocation5 [shape = 'u8[4096]{0}', space=vmem, size = 0x1000, scoped, tag = 'input window, operand 1, single buffered']
    #allocation6 [shape = 's32[1]{0}', space=sflag, size = 0x4, scoped, tag = 'scoped memory for tpu_custom_call.1']
    #allocation7 [shape = 'u8[8192]{0}', space=vmem, size = 0x2000, scoped, tag = 'input window, operand 2, single buffered']
    #allocation8 [shape = 'u8[32768]{0}', space=vmem, size = 0x8000, scoped, tag = 'input window, operand 4, single buffered']
    #allocation9 [shape = 's32[1]{0}', space=sflag, size = 0x4, scoped, tag = 'scoped memory for tpu_custom_call.1']
    #allocation10 [shape = 'u8[512]{0}', space=vmem, size = 0x400, scoped, tag = 'output window, operand 0, single buffered']
    %11 = vsyncpa [#allocation3], 0
    %12 = vsyncpa [#allocation6], 0
    %13 = vsyncpa [#allocation9], 0
    %14 = vsyncpa [#allocation4], 0
    // Predicated region
    $region2: #{tpu_custom_call.1} parent=1 // pred_check
      _
    $region3: #{tpu_custom_call.1} parent=1 // pred_check_branch
      %16 = sbr.rel (0) target = $region5
    $region4: #{tpu_custom_call.1} parent=1 // pred_region
      %18 = vsyncadd [#allocation3], 0
      %s20 = sshll.u32 %s0, 4
      %s21 = int_to_ptr.hbm [resolvable:$true] %s20
      %s22 = sshll.u32 [#allocation2], 4
      %s23 = int_to_ptr.vmem [resolvable:$true] %s22
      %25 = dma.hbm_to_vmem [thread:$0]  %s21, 128, %s23, [#allocation3]
    $region5: #{tpu_custom_call.1} parent=1 // pred_fallthru
      _
    // Predicated region
    $region6: #{tpu_custom_call.1} parent=1 // pred_check
      _
    $region7: #{tpu_custom_call.1} parent=1 // pred_check_branch
      %27 = sbr.rel (0) target = $region9
    $region8: #{tpu_custom_call.1} parent=1 // pred_region
      %29 = vsyncadd [#allocation6], 0
      %s31 = sshll.u32 %s1, 4
      %s32 = int_to_ptr.hbm [resolvable:$true] %s31
      %s33 = sshll.u32 [#allocation5], 4
      %s34 = int_to_ptr.vmem [resolvable:$true] %s33
      %36 = dma.hbm_to_vmem [thread:$0]  %s32, 128, %s34, [#allocation6]
    $region9: #{tpu_custom_call.1} parent=1 // pred_fallthru
      _
    // Predicated region
    $region10: #{tpu_custom_call.1} parent=1 // pred_check
      _
    $region11: #{tpu_custom_call.1} parent=1 // pred_check_branch
      %38 = sbr.rel (0) target = $region13
    $region12: #{tpu_custom_call.1} parent=1 // pred_region
      %40 = vsyncadd [#allocation6], 0
      %s41 = sshll.u32 %s2, 4
      %s42 = int_to_ptr.hbm [resolvable:$true] %s41
      %s43 = sshll.u32 [#allocation7], 4
      %s44 = int_to_ptr.vmem [resolvable:$true] %s43
      %49 = dma.hbm_to_vmem [thread:$0]  %s42, 256, %s44, [#allocation6], 64, 64, 4
    $region13: #{tpu_custom_call.1} parent=1 // pred_fallthru
      _
    // Predicated region
    $region14: #{tpu_custom_call.1} parent=1 // pred_check
      _
    $region15: #{tpu_custom_call.1} parent=1 // pred_check_branch
      %51 = sbr.rel (0) target = $region17
    $region16: #{tpu_custom_call.1} parent=1 // pred_region
      _
    $region17: #{tpu_custom_call.1} parent=1 // pred_fallthru
      _
    // Predicated region
    $region18: #{tpu_custom_call.1} parent=1 // pred_check
      _
    $region19: #{tpu_custom_call.1} parent=1 // pred_check_branch
      %53 = sbr.rel (0) target = $region21
    $region20: #{tpu_custom_call.1} parent=1 // pred_region
      %55 = vsyncadd [#allocation9], 0
      %s56 = sshll.u32 %s4, 4
      %s57 = int_to_ptr.hbm [resolvable:$true] %s56
      %s58 = sshll.u32 [#allocation8], 4
      %s59 = int_to_ptr.vmem [resolvable:$true] %s58
      %64 = dma.hbm_to_vmem [thread:$0]  %s57, 1024, %s59, [#allocation9], 64, 64, 4
    $region21: #{tpu_custom_call.1} parent=1 // pred_fallthru
      _
    // Predicated region
    $region22: #{tpu_custom_call.1} parent=1 // pred_check
      _
    $region23: #{tpu_custom_call.1} parent=1 // pred_check_branch
      %66 = sbr.rel (0) target = $region25
    $region24: #{tpu_custom_call.1} parent=1 // pred_region
      _
    $region25: #{tpu_custom_call.1} parent=1 // pred_fallthru
      _
    // Predicated region
    $region26: #{tpu_custom_call.1} parent=1 // pred_check
      _
    $region27: #{tpu_custom_call.1} parent=1 // pred_check_branch
      %68 = sbr.rel (0) target = $region29
    $region28: #{tpu_custom_call.1} parent=1 // pred_region
      %70 = dma.done [#allocation3], 128
    $region29: #{tpu_custom_call.1} parent=1 // pred_fallthru
      _
    // Predicated region
    $region30: #{tpu_custom_call.1} parent=1 // pred_check
      _
    $region31: #{tpu_custom_call.1} parent=1 // pred_check_branch
      %72 = sbr.rel (0) target = $region33
    $region32: #{tpu_custom_call.1} parent=1 // pred_region
      %74 = dma.done [#allocation6], 128
    $region33: #{tpu_custom_call.1} parent=1 // pred_fallthru
      _
    // Predicated region
    $region34: #{tpu_custom_call.1} parent=1 // pred_check
      _
    $region35: #{tpu_custom_call.1} parent=1 // pred_check_branch
      %76 = sbr.rel (0) target = $region37
    $region36: #{tpu_custom_call.1} parent=1 // pred_region
      %78 = dma.done [#allocation6], 256
    $region37: #{tpu_custom_call.1} parent=1 // pred_fallthru
      _
    // Predicated region
    $region38: #{tpu_custom_call.1} parent=1 // pred_check
      _
    $region39: #{tpu_custom_call.1} parent=1 // pred_check_branch
      %80 = sbr.rel (0) target = $region41
    $region40: #{tpu_custom_call.1} parent=1 // pred_region
      %82 = dma.done [#allocation9], 1024
    $region41: #{tpu_custom_call.1} parent=1 // pred_fallthru
      _
    %v84 = vld [vmem:[#allocation7] sm:$0xf]
    %v85 = vld [vmem:[#allocation7 + $0x4] sm:$0xf]
    %v86 = vld [vmem:[#allocation7 + $0x8] sm:$0xf]
    %v87 = vld [vmem:[#allocation7 + $0xc] sm:$0xf]
    %v88 = vld [vmem:[#allocation8] sm:$0xf]
    %v89 = vld [vmem:[#allocation8 + $0x4] sm:$0xf]
    %v90 = vld [vmem:[#allocation8 + $0x8] sm:$0xf]
    %v91 = vld [vmem:[#allocation8 + $0xc] sm:$0xf]
    %v92 = vld [vmem:[#allocation8 + $0x10] sm:$0xf]
    %v93 = vld [vmem:[#allocation8 + $0x14] sm:$0xf]
    %v94 = vld [vmem:[#allocation8 + $0x18] sm:$0xf]
    %v95 = vld [vmem:[#allocation8 + $0x1c] sm:$0xf]
    %v96 = vld [vmem:[#allocation8 + $0x20] sm:$0xf]
    %v97 = vld [vmem:[#allocation8 + $0x24] sm:$0xf]
    %v98 = vld [vmem:[#allocation8 + $0x28] sm:$0xf]
    %v99 = vld [vmem:[#allocation8 + $0x2c] sm:$0xf]
    %v100 = vld [vmem:[#allocation8 + $0x30] sm:$0xf]
    %v101 = vld [vmem:[#allocation8 + $0x34] sm:$0xf]
    %v102 = vld [vmem:[#allocation8 + $0x38] sm:$0xf]
    %v103 = vld [vmem:[#allocation8 + $0x3c] sm:$0xf]
    %v104 = vld [vmem:[%s3] sm:$0x1]
    %v105 = vld [vmem:[%s5] sm:$0x1]
    %v106 = vld [vmem:[#allocation2] sm:$0xff]
    %v107 = vpack.c.bf16 %v106, %v106
    %v109 = vperm.slane %v104, 0
    %v115 = vunpack.c.l.b16 %v84
    %v116 = vunpack.c.l.b16 %v85
    %v117 = vunpack.c.l.b16 %v86
    %v118 = vunpack.c.l.b16 %v87
    %v119 = vpack.c.b16 %v116, %v115
    %v120 = vpack.c.b16 %v118, %v117
    %vm123 = vcmask 261120
    %v125 = vsel %vm123, %v107, 0
    %127 = vmatpush.bf16.msra.mxu0 0
    %128 = vmatpush.bf16.msra.mxu0 0
    %129 = vmatpush.bf16.msra.mxu0 0
    %130 = vmatpush.bf16.msra.mxu0 0
    %131 = vmatpush.bf16.msra.mxu0 0
    %132 = vmatpush.bf16.msra.mxu0 0
    %133 = vmatpush.bf16.msra.mxu0 %v120
    %134 = vmatpush.bf16.msra.mxu0 %v119
    %135 = vmatmul.bf16.gmra.mxu0 %v125
    %v136 = vpop.f32.mrf.mxu0
    %v137 = vadd.f32 %v109, %v136
    %v138 = vpop.f32.mrf.mxu0
    %139 = vdwg.mxu0
    %v140 = vmax.f32 %v137, 0.0
    %v141 = vpack.c.bf16 %v140, %v140
    %v143 = vperm.slane %v105, 0
    %v161 = vunpack.c.l.b16 %v88
    %v162 = vunpack.c.l.b16 %v89
    %v163 = vunpack.c.l.b16 %v90
    %v164 = vunpack.c.l.b16 %v91
    %v165 = vunpack.c.l.b16 %v92
    %v166 = vunpack.c.l.b16 %v93
    %v167 = vunpack.c.l.b16 %v94
    %v168 = vunpack.c.l.b16 %v95
    %v169 = vunpack.c.l.b16 %v96
    %v170 = vunpack.c.l.b16 %v97
    %v171 = vunpack.c.l.b16 %v98
    %v172 = vunpack.c.l.b16 %v99
    %v173 = vunpack.c.l.b16 %v100
    %v174 = vunpack.c.l.b16 %v101
    %v175 = vunpack.c.l.b16 %v102
    %v176 = vunpack.c.l.b16 %v103
    %v177 = vpack.c.b16 %v162, %v161
    %v178 = vpack.c.b16 %v164, %v163
    %v179 = vpack.c.b16 %v166, %v165
    %v180 = vpack.c.b16 %v168, %v167
    %v181 = vpack.c.b16 %v170, %v169
    %v182 = vpack.c.b16 %v172, %v171
    %v183 = vpack.c.b16 %v174, %v173
    %v184 = vpack.c.b16 %v176, %v175
    %193 = vmatpush.bf16.msra.mxu0 %v184
    %194 = vmatpush.bf16.msra.mxu0 %v183
    %195 = vmatpush.bf16.msra.mxu0 %v182
    %196 = vmatpush.bf16.msra.mxu0 %v181
    %197 = vmatpush.bf16.msra.mxu0 %v180
    %198 = vmatpush.bf16.msra.mxu0 %v179
    %199 = vmatpush.bf16.msra.mxu0 %v178
    %200 = vmatpush.bf16.msra.mxu0 %v177
    %201 = vmatmul.bf16.gmra.mxu0 %v141
    %v202 = vpop.f32.mrf.mxu0
    %v203 = vadd.f32 %v143, %v202
    %v204 = vpop.f32.mrf.mxu0
    %205 = vdwg.mxu0
    %v206 = vld [vmem:[#allocation5] sm:$0xff]
    %v207 = vpack.c.bf16 %v206, %v206
    %v209 = vsel %vm123, %v207, 0
    %211 = vmatpush.bf16.msra.mxu0 0
    %212 = vmatpush.bf16.msra.mxu0 0
    %213 = vmatpush.bf16.msra.mxu0 0
    %214 = vmatpush.bf16.msra.mxu0 0
    %215 = vmatpush.bf16.msra.mxu0 0
    %216 = vmatpush.bf16.msra.mxu0 0
    %217 = vmatpush.bf16.msra.mxu0 %v120
    %218 = vmatpush.bf16.msra.mxu0 %v119
    %219 = vmatmul.bf16.gmra.mxu0 %v209
    %v220 = vpop.f32.mrf.mxu0
    %v221 = vadd.f32 %v109, %v220
    %v222 = vpop.f32.mrf.mxu0
    %223 = vdwg.mxu0
    %v224 = vmax.f32 %v221, 0.0
    %v225 = vpack.c.bf16 %v224, %v224
    %226 = vmatpush.bf16.msra.mxu0 %v184
    %227 = vmatpush.bf16.msra.mxu0 %v183
    %228 = vmatpush.bf16.msra.mxu0 %v182
    %229 = vmatpush.bf16.msra.mxu0 %v181
    %230 = vmatpush.bf16.msra.mxu0 %v180
    %231 = vmatpush.bf16.msra.mxu0 %v179
    %232 = vmatpush.bf16.msra.mxu0 %v178
    %233 = vmatpush.bf16.msra.mxu0 %v177
    %234 = vmatmul.bf16.gmra.mxu0 %v225
    %v235 = vpop.f32.mrf.mxu0
    %v236 = vadd.f32 %v143, %v235
    %v237 = vpop.f32.mrf.mxu0
    %238 = vdwg.mxu0
    %v239 = vmul.f32 %v203, %v236
    %240 = vadd.xlane.f32.xlu0 %v239
    %v241 = vpop.xlane.xlu0 %240
    %v242 = vmul.f32 %v203, %v203
    %243 = vadd.xlane.f32.xlu0 %v242
    %v244 = vpop.xlane.xlu0 %243
    %v245 = vmul.f32 %v236, %v236
    %246 = vadd.xlane.f32.xlu0 %v245
    %v247 = vpop.xlane.xlu0 %246
    %v248 = vmul.f32 %v244, %v247
    %v249 = vmax.f32 %v248, 1e-16
    %v250 = vrsqrt.pop %v249
    %v251 = vmul.f32 %v250, %v249
    %v252 = vmul.f32 %v251, %v250
    %v253 = vmul.f32 0.5, %v252
    %v254 = vsub.f32 1.5, %v253
    %v255 = vmul.f32 %v250, %v254
    %vm256 = vweird.f32 %v249
    %vm257 = vweird.f32 %v250
    %vm258 = vmor %vm256, %vm257
    %v259 = vsel %vm258, %v250, %v255
    %v260 = vmul.f32 %v241, %v259
    %v262 = vlaneseq
    %v263 = vand.u32 %v262, 127
    %v264 = vperm.slane %v260, %v263
    %vm266 = vcmask 57344
    %267 = vst.msk [vmem:[#allocation10] sm:$0x1] %vm266, %v264
    // Predicated region
    $region42: #{tpu_custom_call.1} parent=1 // pred_check
      _
    $region43: #{tpu_custom_call.1} parent=1 // pred_check_branch
      %269 = sbr.rel (0) target = $region45
    $region44: #{tpu_custom_call.1} parent=1 // pred_region
      %271 = vsyncadd [#allocation4], 0
      %s273 = sshll.u32 [#allocation10], 4
      %s274 = int_to_ptr.vmem [resolvable:$true] %s273
      %s275 = sshll.u32 %s6, 4
      %s276 = int_to_ptr.hbm [resolvable:$true] %s275
      %278 = dma.vmem_to_hbm [thread:$0]  %s274, 16, %s276, [#allocation4]
    $region45: #{tpu_custom_call.1} parent=1 // pred_fallthru
      _
    // Predicated region
    $region46: #{tpu_custom_call.1} parent=1 // pred_check
      _
    $region47: #{tpu_custom_call.1} parent=1 // pred_check_branch
      %280 = sbr.rel (0) target = $region49
    $region48: #{tpu_custom_call.1} parent=1 // pred_region
      %282 = dma.done [#allocation4], 16
    $region49: #{tpu_custom_call.1} parent=1 // pred_fallthru
      _
    %283 = vsyncpa [#allocation3], 1
    %284 = vsyncpa [#allocation6], 1
    %285 = vsyncpa [#allocation9], 1
    %286 = vsyncpa [#allocation4], 1

</llo_original>
